<compile_context>
chip_gen: v7x
topology: tpu7x:2x2x1
jax: 0.10.0
libtpu: 0.0.40
codegen_flags: <defaults>
</compile_context>

<pallas_src>
import jax
import jax.numpy as jnp
from jax.experimental import pallas as pl
from jax.experimental.pallas import tpu as pltpu


def _round_up(x, m):
    return ((x + m - 1) // m) * m


def rank_kernel(x_ref, sent_ref, wproj_ref, benc_ref,
                w1_ref, b1_ref, gamma_ref, beta_ref,
                w2_ref, b2_ref,
                out_ref):
    # ---- simplified LXRT encoder stand-in (object pooling already hoisted to
    #      the wrapper; single fused projection matmul) ----
    vis = (jnp.dot(x_ref[...], wproj_ref[...],
                   preferred_element_type=jnp.float32)
           + benc_ref[...])                                      # (tb, hid)
    x = jnp.tanh(vis + sent_ref[...])                            # pooled output

    # ---- logit_fc: Linear -> GeLU(erf) -> BertLayerNorm(eps=1e-12) -> Linear ----
    h = jnp.dot(x, w1_ref[...], preferred_element_type=jnp.float32) + b1_ref[...]
    # exact BERT GeLU: x * 0.5 * (1 + erf(x / sqrt(2)))
    h = h * 0.5 * (1.0 + jax.lax.erf(h * jnp.float32(0.7071067811865475)))
    # BertLayerNorm (biased variance), rsqrt on the EUP instead of a VPU divide
    u = jnp.mean(h, axis=-1, keepdims=True)
    d = h - u
    s = jnp.mean(d * d, axis=-1, keepdims=True)
    h = d * jax.lax.rsqrt(s + jnp.float32(1e-12))
    h = h * gamma_ref[...] + beta_ref[...]
    # final Linear(hid, 1) as a lane reduction (no N=1 MXU pass)
    logit = jnp.sum(h * w2_ref[...], axis=-1, keepdims=True) + b2_ref[0, 0]
    out_ref[...] = logit.astype(out_ref.dtype)


def rank_model_forward(feat, pos, sent_emb, params, *, batch_tile=8):
    b, o, f = feat.shape
    hid = params["w1"].shape[0]

    # --- algebraic hoist: mean over objects BEFORE the (linear) projection ---
    feat_m = jnp.mean(feat, axis=1)                        # (b, f)
    pos_m = jnp.mean(pos, axis=1)                          # (b, 4)
    x_in = jnp.concatenate([feat_m, pos_m], axis=-1)       # (b, f+4)

    # --- fuse Wf/Wp and zero-pad K up to a multiple of 128 (wrapper-side) ---
    k = f + 4
    kp = _round_up(k, 128)
    x_in = jnp.pad(x_in, ((0, 0), (0, kp - k)))            # (b, kp)
    w_proj = jnp.concatenate([params["wf"], params["wp"]], axis=0)   # (k, hid)
    w_proj = jnp.pad(w_proj, ((0, kp - k), (0, 0)))        # (kp, hid)

    # final Linear(hid,1) weight passed as a (1, hid) row for the lane reduction
    w2_row = params["w2"].reshape(1, hid)

    # --- pad batch to a multiple of the batch tile; grid is parallel over it ---
    tb = batch_tile
    b_pad = _round_up(b, tb)
    x_in = jnp.pad(x_in, ((0, b_pad - b), (0, 0)))
    sent_p = jnp.pad(sent_emb, ((0, b_pad - b), (0, 0)))

    grid = (b_pad // tb,)
    out = pl.pallas_call(
        rank_kernel,
        out_shape=jax.ShapeDtypeStruct((b_pad, 1), jnp.float32),
        grid=grid,
        in_specs=[
            pl.BlockSpec((tb, kp), lambda i: (i, 0)),       # pooled [feat||pos]
            pl.BlockSpec((tb, hid), lambda i: (i, 0)),      # sentence embedding
            pl.BlockSpec((kp, hid), lambda i: (0, 0)),      # fused projection W
            pl.BlockSpec((1, hid), lambda i: (0, 0)),       # encoder bias
            pl.BlockSpec((hid, hid), lambda i: (0, 0)),     # w1
            pl.BlockSpec((1, hid), lambda i: (0, 0)),       # b1
            pl.BlockSpec((1, hid), lambda i: (0, 0)),       # gamma
            pl.BlockSpec((1, hid), lambda i: (0, 0)),       # beta
            pl.BlockSpec((1, hid), lambda i: (0, 0)),       # w2 row
            pl.BlockSpec(memory_space=pltpu.MemorySpace.SMEM),  # b2 scalar
        ],
        out_specs=pl.BlockSpec((tb, 1), lambda i: (i, 0)),
        compiler_params=pltpu.CompilerParams(
            dimension_semantics=("parallel",),
            vmem_limit_bytes=64 << 20,
        ),
    )(x_in, sent_p, w_proj, params["benc"],
      params["w1"], params["b1"], params["gamma"], params["beta"],
      w2_row, params["b2"])
    return out[:b]


def init_params(key, f, hid):
    # BERT-style init: normal(std=0.02) weights, zero biases, LN gamma=1 beta=0.
    # NOTE: at real LXMERT sizes pad hid to a multiple of 128 for lane-dense vregs.
    ks = jax.random.split(key, 5)
    std = 0.02
    return {
        "wf":    jax.random.normal(ks[0], (f, hid), jnp.float32) * std,
        "wp":    jax.random.normal(ks[1], (4, hid), jnp.float32) * std,
        "benc":  jnp.zeros((1, hid), jnp.float32),
        "w1":    jax.random.normal(ks[2], (hid, hid), jnp.float32) * std,
        "b1":    jnp.zeros((1, hid), jnp.float32),
        "gamma": jnp.ones((1, hid), jnp.float32),
        "beta":  jnp.zeros((1, hid), jnp.float32),
        "w2":    jax.random.normal(ks[3], (hid, 1), jnp.float32) * std,
        "b2":    jnp.zeros((1, 1), jnp.float32),
    }


if __name__ == "__main__":
    key = jax.random.PRNGKey(0)
    b, o, f, hid = 2, 8, 16, 32
    seq_len, vocab = 8, 100   # stand-in for MAX_RANK_LENGTH=40 string sentences

    k_feat, k_pos, k_ids, k_emb, k_par = jax.random.split(key, 5)
    feat = jax.random.normal(k_feat, (b, o, f), jnp.float32)
    pos = jax.random.uniform(k_pos, (b, o, 4), jnp.float32)

    # glue: deterministic token ids + embedding lookup + mean-pool -> sentence emb
    token_ids = jax.random.randint(k_ids, (b, seq_len), 0, vocab)
    emb_table = jax.random.normal(k_emb, (vocab, hid), jnp.float32) * 0.02
    sent_emb = jnp.mean(emb_table[token_ids], axis=1)            # (b, hid)

    params = init_params(k_par, f, hid)

    logit = rank_model_forward(feat, pos, sent_emb, params)
    jax.block_until_ready(logit)
    assert logit.shape == (b, 1)
    print("KERNEL_OK")
</pallas_src>

<mosaic_0001>
module attributes {stable_mosaic.version = 11 : i64} {
  func.func @rank_kernel(%arg0: i32, %arg1: memref<8x128xf32, #tpu.memory_space<vmem>>, %arg2: memref<8x32xf32, #tpu.memory_space<vmem>>, %arg3: memref<128x32xf32, #tpu.memory_space<vmem>>, %arg4: memref<1x32xf32, #tpu.memory_space<vmem>>, %arg5: memref<32x32xf32, #tpu.memory_space<vmem>>, %arg6: memref<1x32xf32, #tpu.memory_space<vmem>>, %arg7: memref<1x32xf32, #tpu.memory_space<vmem>>, %arg8: memref<1x32xf32, #tpu.memory_space<vmem>>, %arg9: memref<1x32xf32, #tpu.memory_space<vmem>>, %arg10: memref<1x1xf32, #tpu.memory_space<smem>>, %arg11: memref<8x1xf32, #tpu.memory_space<vmem>>) attributes {dimension_semantics = [#tpu.dimension_semantics<parallel>], iteration_bounds = array<i64: 1>, scalar_prefetch = 0 : i64, scratch_operands = 0 : i64, tpu.core_type = #tpu.core_type<tc>, window_params = [{transform_indices = @transform_0, window_bounds = array<i64: 8, 128>}, {transform_indices = @transform_1, window_bounds = array<i64: 8, 32>}, {pipeline_mode = #tpu.pipeline_mode<synchronous>, transform_indices = @transform_2, window_bounds = array<i64: 128, 32>}, {pipeline_mode = #tpu.pipeline_mode<synchronous>, transform_indices = @transform_3, window_bounds = array<i64: 1, 32>}, {pipeline_mode = #tpu.pipeline_mode<synchronous>, transform_indices = @transform_4, window_bounds = array<i64: 32, 32>}, {pipeline_mode = #tpu.pipeline_mode<synchronous>, transform_indices = @transform_5, window_bounds = array<i64: 1, 32>}, {pipeline_mode = #tpu.pipeline_mode<synchronous>, transform_indices = @transform_6, window_bounds = array<i64: 1, 32>}, {pipeline_mode = #tpu.pipeline_mode<synchronous>, transform_indices = @transform_7, window_bounds = array<i64: 1, 32>}, {pipeline_mode = #tpu.pipeline_mode<synchronous>, transform_indices = @transform_8, window_bounds = array<i64: 1, 32>}, {transform_indices = @transform_9, window_bounds = array<i64: 1, 1>}, {transform_indices = @transform_10, window_bounds = array<i64: 8, 1>}]} {
    %c0 = arith.constant 0 : index
    %c0_0 = arith.constant 0 : index
    %0 = vector.load %arg1[%c0, %c0_0] : memref<8x128xf32, #tpu.memory_space<vmem>>, vector<8x128xf32>
    %c0_1 = arith.constant 0 : index
    %c0_2 = arith.constant 0 : index
    %1 = vector.load %arg3[%c0_1, %c0_2] : memref<128x32xf32, #tpu.memory_space<vmem>>, vector<128x32xf32>
    %cst = arith.constant dense<0.000000e+00> : vector<8x32xf32>
    %2 = tpu.matmul %0, %1, %cst {dimension_numbers = #tpu.dot_dimension_numbers<[1], [0], [0], [1], [0, 0, 1, 1], [], []>} : vector<8x128xf32>, vector<128x32xf32>, vector<8x32xf32> -> vector<8x32xf32>
    %c0_3 = arith.constant 0 : index
    %c0_4 = arith.constant 0 : index
    %3 = vector.load %arg4[%c0_3, %c0_4] : memref<1x32xf32, #tpu.memory_space<vmem>>, vector<1x32xf32>
    %4 = vector.broadcast %3 : vector<1x32xf32> to vector<8x32xf32>
    %5 = arith.addf %2, %4 : vector<8x32xf32>
    %c0_5 = arith.constant 0 : index
    %c0_6 = arith.constant 0 : index
    %6 = vector.load %arg2[%c0_5, %c0_6] : memref<8x32xf32, #tpu.memory_space<vmem>>, vector<8x32xf32>
    %7 = arith.addf %5, %6 : vector<8x32xf32>
    %8 = math.tanh %7 : vector<8x32xf32>
    %c0_7 = arith.constant 0 : index
    %c0_8 = arith.constant 0 : index
    %9 = vector.load %arg5[%c0_7, %c0_8] : memref<32x32xf32, #tpu.memory_space<vmem>>, vector<32x32xf32>
    %cst_9 = arith.constant dense<0.000000e+00> : vector<8x32xf32>
    %10 = tpu.matmul %8, %9, %cst_9 {dimension_numbers = #tpu.dot_dimension_numbers<[1], [0], [0], [1], [0, 0, 1, 1], [], []>} : vector<8x32xf32>, vector<32x32xf32>, vector<8x32xf32> -> vector<8x32xf32>
    %c0_10 = arith.constant 0 : index
    %c0_11 = arith.constant 0 : index
    %11 = vector.load %arg6[%c0_10, %c0_11] : memref<1x32xf32, #tpu.memory_space<vmem>>, vector<1x32xf32>
    %12 = vector.broadcast %11 : vector<1x32xf32> to vector<8x32xf32>
    %13 = arith.addf %10, %12 : vector<8x32xf32>
    %cst_12 = arith.constant 5.000000e-01 : f32
    %14 = vector.broadcast %cst_12 : f32 to vector<8x32xf32>
    %15 = arith.mulf %13, %14 : vector<8x32xf32>
    %cst_13 = arith.constant 0.707106769 : f32
    %16 = vector.broadcast %cst_13 : f32 to vector<8x32xf32>
    %17 = arith.mulf %13, %16 : vector<8x32xf32>
    %18 = math.erf %17 : vector<8x32xf32>
    %cst_14 = arith.constant 1.000000e+00 : f32
    %19 = vector.broadcast %cst_14 : f32 to vector<8x32xf32>
    %20 = arith.addf %19, %18 : vector<8x32xf32>
    %21 = arith.mulf %15, %20 : vector<8x32xf32>
    %cst_15 = arith.constant dense<0.000000e+00> : vector<8xf32>
    %22 = vector.multi_reduction <add>, %21, %cst_15 [1] : vector<8x32xf32> to vector<8xf32>
    %23 = vector.shape_cast %22 : vector<8xf32> to vector<8x1xf32>
    %cst_16 = arith.constant 3.200000e+01 : f32
    %24 = vector.broadcast %cst_16 : f32 to vector<8x1xf32>
    %25 = arith.divf %23, %24 : vector<8x1xf32>
    %26 = vector.broadcast %25 : vector<8x1xf32> to vector<8x32xf32>
    %27 = arith.subf %21, %26 : vector<8x32xf32>
    %28 = arith.mulf %27, %27 : vector<8x32xf32>
    %cst_17 = arith.constant dense<0.000000e+00> : vector<8xf32>
    %29 = vector.multi_reduction <add>, %28, %cst_17 [1] : vector<8x32xf32> to vector<8xf32>
    %30 = vector.shape_cast %29 : vector<8xf32> to vector<8x1xf32>
    %cst_18 = arith.constant 3.200000e+01 : f32
    %31 = vector.broadcast %cst_18 : f32 to vector<8x1xf32>
    %32 = arith.divf %30, %31 : vector<8x1xf32>
    %cst_19 = arith.constant 9.99999996E-13 : f32
    %33 = vector.broadcast %cst_19 : f32 to vector<8x1xf32>
    %34 = arith.addf %32, %33 : vector<8x1xf32>
    %35 = math.rsqrt %34 : vector<8x1xf32>
    %36 = vector.broadcast %35 : vector<8x1xf32> to vector<8x32xf32>
    %37 = arith.mulf %27, %36 : vector<8x32xf32>
    %c0_20 = arith.constant 0 : index
    %c0_21 = arith.constant 0 : index
    %38 = vector.load %arg7[%c0_20, %c0_21] : memref<1x32xf32, #tpu.memory_space<vmem>>, vector<1x32xf32>
    %39 = vector.broadcast %38 : vector<1x32xf32> to vector<8x32xf32>
    %40 = arith.mulf %37, %39 : vector<8x32xf32>
    %c0_22 = arith.constant 0 : index
    %c0_23 = arith.constant 0 : index
    %41 = vector.load %arg8[%c0_22, %c0_23] : memref<1x32xf32, #tpu.memory_space<vmem>>, vector<1x32xf32>
    %42 = vector.broadcast %41 : vector<1x32xf32> to vector<8x32xf32>
    %43 = arith.addf %40, %42 : vector<8x32xf32>
    %c0_24 = arith.constant 0 : index
    %c0_25 = arith.constant 0 : index
    %44 = vector.load %arg9[%c0_24, %c0_25] : memref<1x32xf32, #tpu.memory_space<vmem>>, vector<1x32xf32>
    %45 = vector.broadcast %44 : vector<1x32xf32> to vector<8x32xf32>
    %46 = arith.mulf %43, %45 : vector<8x32xf32>
    %cst_26 = arith.constant dense<0.000000e+00> : vector<8xf32>
    %47 = vector.multi_reduction <add>, %46, %cst_26 [1] : vector<8x32xf32> to vector<8xf32>
    %48 = vector.shape_cast %47 : vector<8xf32> to vector<8x1xf32>
    %c0_27 = arith.constant 0 : index
    %c0_28 = arith.constant 0 : index
    %49 = memref.load %arg10[%c0_27, %c0_28] : memref<1x1xf32, #tpu.memory_space<smem>>
    %50 = vector.broadcast %49 : f32 to vector<8x1xf32>
    %51 = arith.addf %48, %50 : vector<8x1xf32>
    %c0_29 = arith.constant 0 : index
    %c0_30 = arith.constant 0 : index
    %52 = vector.load %arg11[%c0_29, %c0_30] : memref<8x1xf32, #tpu.memory_space<vmem>>, vector<8x1xf32>
    tpu.vector_store %arg11[%c0_29, %c0_30], %51 {strides = array<i32>} : memref<8x1xf32, #tpu.memory_space<vmem>>, vector<8x1xf32>,
    return
  }
  func.func @transform_0(%arg0: i32) -> (i32, i32) {
    %c0_i32 = arith.constant 0 : i32
    %c0_i32_0 = arith.constant 0 : i32
    return %arg0, %c0_i32 : i32, i32
  }
  func.func @transform_1(%arg0: i32) -> (i32, i32) {
    %c0_i32 = arith.constant 0 : i32
    %c0_i32_0 = arith.constant 0 : i32
    return %arg0, %c0_i32 : i32, i32
  }
  func.func @transform_2(%arg0: i32) -> (i32, i32) {
    %c0_i32 = arith.constant 0 : i32
    %c0_i32_0 = arith.constant 0 : i32
    %c0_i32_1 = arith.constant 0 : i32
    return %c0_i32, %c0_i32_0 : i32, i32
  }
  func.func @transform_3(%arg0: i32) -> (i32, i32) {
    %c0_i32 = arith.constant 0 : i32
    %c0_i32_0 = arith.constant 0 : i32
    %c0_i32_1 = arith.constant 0 : i32
    return %c0_i32, %c0_i32_0 : i32, i32
  }
  func.func @transform_4(%arg0: i32) -> (i32, i32) {
    %c0_i32 = arith.constant 0 : i32
    %c0_i32_0 = arith.constant 0 : i32
    %c0_i32_1 = arith.constant 0 : i32
    return %c0_i32, %c0_i32_0 : i32, i32
  }
  func.func @transform_5(%arg0: i32) -> (i32, i32) {
    %c0_i32 = arith.constant 0 : i32
    %c0_i32_0 = arith.constant 0 : i32
    %c0_i32_1 = arith.constant 0 : i32
    return %c0_i32, %c0_i32_0 : i32, i32
  }
  func.func @transform_6(%arg0: i32) -> (i32, i32) {
    %c0_i32 = arith.constant 0 : i32
    %c0_i32_0 = arith.constant 0 : i32
    %c0_i32_1 = arith.constant 0 : i32
    return %c0_i32, %c0_i32_0 : i32, i32
  }
  func.func @transform_7(%arg0: i32) -> (i32, i32) {
    %c0_i32 = arith.constant 0 : i32
    %c0_i32_0 = arith.constant 0 : i32
    %c0_i32_1 = arith.constant 0 : i32
    return %c0_i32, %c0_i32_0 : i32, i32
  }
  func.func @transform_8(%arg0: i32) -> (i32, i32) {
    %c0_i32 = arith.constant 0 : i32
    %c0_i32_0 = arith.constant 0 : i32
    %c0_i32_1 = arith.constant 0 : i32
    return %c0_i32, %c0_i32_0 : i32, i32
  }
  func.func @transform_9(%arg0: i32) -> (i32, i32) {
    %c0_i32 = arith.constant 0 : i32
    %c0_i32_0 = arith.constant 0 : i32
    %c0_i32_1 = arith.constant 0 : i32
    return %c0_i32, %c0_i32_0 : i32, i32
  }
  func.func @transform_10(%arg0: i32) -> (i32, i32) {
    %c0_i32 = arith.constant 0 : i32
    %c0_i32_0 = arith.constant 0 : i32
    return %arg0, %c0_i32 : i32, i32
  }
}

</mosaic_0001>

<llo_original>
// kernel: tpu_custom_call.1
$region0: #{tpu_custom_call.1}
  #allocation0 [shape = 'u32[]', space=smem, size = 0x4, offset = 0x4, fixed_abs, tag = 'smem constant byte address 0x4 - core index']
  #allocation1 [shape = 'u32[144,128]{1,0:T(1,128)}', space=vmem, size = 0x12000, scoped, tag = 'internal scratch']
  #allocation2 [shape = 'f32[1,1]{1,0:T(1,128)S(6)}', space=smem, size = 0x200, scoped, tag = 'scoped memory for tpu_custom_call.1']
  %s0 = inlined_call_operand.hbm [shape: f32[8,128], index: 0, kind: input, shape index: {}]
  %s1 = inlined_call_operand.hbm [shape: f32[8,32], index: 1, kind: input, shape index: {}]
  %s2 = inlined_call_operand.hbm [shape: f32[128,32], index: 2, kind: input, shape index: {}]
  %s3 = inlined_call_operand.hbm [shape: f32[1,32], index: 3, kind: input, shape index: {}]
  %s4 = inlined_call_operand.hbm [shape: f32[32,32], index: 4, kind: input, shape index: {}]
  %s5 = inlined_call_operand.hbm [shape: f32[1,32], index: 5, kind: input, shape index: {}]
  %s6 = inlined_call_operand.hbm [shape: f32[1,32], index: 6, kind: input, shape index: {}]
  %s7 = inlined_call_operand.hbm [shape: f32[1,32], index: 7, kind: input, shape index: {}]
  %s8 = inlined_call_operand.hbm [shape: f32[1,32], index: 8, kind: input, shape index: {}]
  %s9 = inlined_call_operand.<no memory space> [shape: f32[1,1], index: 9, kind: input, shape index: {}]
  %s10 = inlined_call_operand.hbm [shape: f32[8,1], index: 10, kind: output, shape index: {}]
  %s11 = sld [smem:[#allocation0]]
  $region86: #{tpu_custom_call.1} parent=0
    _
  %s13 = ssub.s32 1, %s11
  %s14 = scalar_select 0, %s13, %s11
  %15 = sst [smem:[#allocation2]] %s9
  $region1: #{tpu_custom_call.1} parent=0
    #allocation3 [shape = 'u8[4096]{0}', space=vmem, size = 0x1000, scoped, tag = 'input window, operand 0, single buffered']
    #allocation4 [shape = 's32[1]{0}', space=sflag, size = 0x4, scoped, tag = 'scoped memory for tpu_custom_call.1']
    #allocation5 [shape = 's32[1]{0}', space=sflag, size = 0x4, scoped, tag = 'scoped memory for tpu_custom_call.1']
    #allocation6 [shape = 'u8[4096]{0}', space=vmem, size = 0x1000, scoped, tag = 'input window, operand 1, single buffered']
    #allocation7 [shape = 's32[1]{0}', space=sflag, size = 0x4, scoped, tag = 'scoped memory for tpu_custom_call.1']
    #allocation8 [shape = 'u8[65536]{0}', space=vmem, size = 0x10000, scoped, tag = 'input window, operand 2, single buffered']
    #allocation9 [shape = 'u8[512]{0}', space=vmem, size = 0x400, scoped, tag = 'input window, operand 3, single buffered']
    #allocation10 [shape = 's32[1]{0}', space=sflag, size = 0x4, scoped, tag = 'scoped memory for tpu_custom_call.1']
    #allocation11 [shape = 'u8[16384]{0}', space=vmem, size = 0x4000, scoped, tag = 'input window, operand 4, single buffered']
    #allocation12 [shape = 'u8[512]{0}', space=vmem, size = 0x400, scoped, tag = 'input window, operand 5, single buffered']
    #allocation13 [shape = 's32[1]{0}', space=sflag, size = 0x4, scoped, tag = 'scoped memory for tpu_custom_call.1']
    #allocation14 [shape = 'u8[512]{0}', space=vmem, size = 0x400, scoped, tag = 'input window, operand 6, single buffered']
    #allocation15 [shape = 'u8[512]{0}', space=vmem, size = 0x400, scoped, tag = 'input window, operand 7, single buffered']
    #allocation16 [shape = 's32[1]{0}', space=sflag, size = 0x4, scoped, tag = 'scoped memory for tpu_custom_call.1']
    #allocation17 [shape = 'u8[512]{0}', space=vmem, size = 0x400, scoped, tag = 'input window, operand 8, single buffered']
    #allocation18 [shape = 'u8[4096]{0}', space=vmem, size = 0x1000, scoped, tag = 'output window, operand 0, single buffered']
    %16 = vsyncpa [#allocation4], 0
    %17 = vsyncpa [#allocation7], 0
    %18 = vsyncpa [#allocation10], 0
    %19 = vsyncpa [#allocation13], 0
    %20 = vsyncpa [#allocation16], 0
    %21 = vsyncpa [#allocation5], 0
    // Predicated region
    $region2: #{tpu_custom_call.1} parent=1 // pred_check
      _
    $region3: #{tpu_custom_call.1} parent=1 // pred_check_branch
      %23 = sbr.rel (0) target = $region5
    $region4: #{tpu_custom_call.1} parent=1 // pred_region
      %s25 = ssub.s32 128, 128
      %26 = vsyncadd [#allocation4], %s25
      %s28 = sshll.u32 [#allocation3], 4
      %s29 = int_to_ptr.vmem [resolvable:$true] %s28
      %31 = dma.hbm_to_vmem [thread:$0]  %s0, 128, %s29, [#allocation4]
    $region5: #{tpu_custom_call.1} parent=1 // pred_fallthru
      _
    // Predicated region
    $region6: #{tpu_custom_call.1} parent=1 // pred_check
      _
    $region7: #{tpu_custom_call.1} parent=1 // pred_check_branch
      %33 = sbr.rel (0) target = $region9
    $region8: #{tpu_custom_call.1} parent=1 // pred_region
      %s35 = ssub.s32 128, 128
      %36 = vsyncadd [#allocation7], %s35
      %s38 = sshll.u32 [#allocation6], 4
      %s39 = int_to_ptr.vmem [resolvable:$true] %s38
      %41 = dma.hbm_to_vmem [thread:$0]  %s1, 128, %s39, [#allocation7]
    $region9: #{tpu_custom_call.1} parent=1 // pred_fallthru
      _
    // Predicated region
    $region10: #{tpu_custom_call.1} parent=1 // pred_check
      _
    $region11: #{tpu_custom_call.1} parent=1 // pred_check_branch
      %43 = sbr.rel (0) target = $region13
    $region12: #{tpu_custom_call.1} parent=1 // pred_region
      %s45 = ssub.s32 2048, 2048
      %46 = vsyncadd [#allocation7], %s45
      %s47 = sshll.u32 [#allocation8], 4
      %s48 = int_to_ptr.vmem [resolvable:$true] %s47
      %53 = dma.hbm_to_vmem [thread:$0]  %s2, 2048, %s48, [#allocation7], 128, 128, 8
    $region13: #{tpu_custom_call.1} parent=1 // pred_fallthru
      _
    // Predicated region
    $region14: #{tpu_custom_call.1} parent=1 // pred_check
      _
    $region15: #{tpu_custom_call.1} parent=1 // pred_check_branch
      %55 = sbr.rel (0) target = $region17
    $region16: #{tpu_custom_call.1} parent=1 // pred_region
      %s57 = ssub.s32 16, 16
      %58 = vsyncadd [#allocation10], %s57
      %s60 = sshll.u32 [#allocation9], 4
      %s61 = int_to_ptr.vmem [resolvable:$true] %s60
      %63 = dma.hbm_to_vmem [thread:$0]  %s3, 16, %s61, [#allocation10]
    $region17: #{tpu_custom_call.1} parent=1 // pred_fallthru
      _
    // Predicated region
    $region18: #{tpu_custom_call.1} parent=1 // pred_check
      _
    $region19: #{tpu_custom_call.1} parent=1 // pred_check_branch
      %65 = sbr.rel (0) target = $region21
    $region20: #{tpu_custom_call.1} parent=1 // pred_region
      %s67 = ssub.s32 512, 512
      %68 = vsyncadd [#allocation10], %s67
      %s69 = sshll.u32 [#allocation11], 4
      %s70 = int_to_ptr.vmem [resolvable:$true] %s69
      %75 = dma.hbm_to_vmem [thread:$0]  %s4, 512, %s70, [#allocation10], 128, 128, 8
    $region21: #{tpu_custom_call.1} parent=1 // pred_fallthru
      _
    // Predicated region
    $region22: #{tpu_custom_call.1} parent=1 // pred_check
      _
    $region23: #{tpu_custom_call.1} parent=1 // pred_check_branch
      %77 = sbr.rel (0) target = $region25
    $region24: #{tpu_custom_call.1} parent=1 // pred_region
      %s79 = ssub.s32 16, 16
      %80 = vsyncadd [#allocation13], %s79
      %s82 = sshll.u32 [#allocation12], 4
      %s83 = int_to_ptr.vmem [resolvable:$true] %s82
      %85 = dma.hbm_to_vmem [thread:$0]  %s5, 16, %s83, [#allocation13]
    $region25: #{tpu_custom_call.1} parent=1 // pred_fallthru
      _
    // Predicated region
    $region26: #{tpu_custom_call.1} parent=1 // pred_check
      _
    $region27: #{tpu_custom_call.1} parent=1 // pred_check_branch
      %87 = sbr.rel (0) target = $region29
    $region28: #{tpu_custom_call.1} parent=1 // pred_region
      %s89 = ssub.s32 16, 16
      %90 = vsyncadd [#allocation13], %s89
      %s92 = sshll.u32 [#allocation14], 4
      %s93 = int_to_ptr.vmem [resolvable:$true] %s92
      %95 = dma.hbm_to_vmem [thread:$0]  %s6, 16, %s93, [#allocation13]
    $region29: #{tpu_custom_call.1} parent=1 // pred_fallthru
      _
    // Predicated region
    $region30: #{tpu_custom_call.1} parent=1 // pred_check
      _
    $region31: #{tpu_custom_call.1} parent=1 // pred_check_branch
      %97 = sbr.rel (0) target = $region33
    $region32: #{tpu_custom_call.1} parent=1 // pred_region
      %s99 = ssub.s32 16, 16
      %100 = vsyncadd [#allocation16], %s99
      %s102 = sshll.u32 [#allocation15], 4
      %s103 = int_to_ptr.vmem [resolvable:$true] %s102
      %105 = dma.hbm_to_vmem [thread:$0]  %s7, 16, %s103, [#allocation16]
    $region33: #{tpu_custom_call.1} parent=1 // pred_fallthru
      _
    // Predicated region
    $region34: #{tpu_custom_call.1} parent=1 // pred_check
      _
    $region35: #{tpu_custom_call.1} parent=1 // pred_check_branch
      %107 = sbr.rel (0) target = $region37
    $region36: #{tpu_custom_call.1} parent=1 // pred_region
      %s109 = ssub.s32 16, 16
      %110 = vsyncadd [#allocation16], %s109
      %s112 = sshll.u32 [#allocation17], 4
      %s113 = int_to_ptr.vmem [resolvable:$true] %s112
      %115 = dma.hbm_to_vmem [thread:$0]  %s8, 16, %s113, [#allocation16]
    $region37: #{tpu_custom_call.1} parent=1 // pred_fallthru
      _
    // Predicated region
    $region38: #{tpu_custom_call.1} parent=1 // pred_check
      _
    $region39: #{tpu_custom_call.1} parent=1 // pred_check_branch
      %117 = sbr.rel (0) target = $region41
    $region40: #{tpu_custom_call.1} parent=1 // pred_region
      _
    $region41: #{tpu_custom_call.1} parent=1 // pred_fallthru
      _
    // Predicated region
    $region42: #{tpu_custom_call.1} parent=1 // pred_check
      _
    $region43: #{tpu_custom_call.1} parent=1 // pred_check_branch
      %119 = sbr.rel (0) target = $region45
    $region44: #{tpu_custom_call.1} parent=1 // pred_region
      %120 = dma.done [#allocation4], 128
    $region45: #{tpu_custom_call.1} parent=1 // pred_fallthru
      _
    // Predicated region
    $region46: #{tpu_custom_call.1} parent=1 // pred_check
      _
    $region47: #{tpu_custom_call.1} parent=1 // pred_check_branch
      %122 = sbr.rel (0) target = $region49
    $region48: #{tpu_custom_call.1} parent=1 // pred_region
      %123 = dma.done [#allocation7], 128
    $region49: #{tpu_custom_call.1} parent=1 // pred_fallthru
      _
    // Predicated region
    $region50: #{tpu_custom_call.1} parent=1 // pred_check
      _
    $region51: #{tpu_custom_call.1} parent=1 // pred_check_branch
      %125 = sbr.rel (0) target = $region53
    $region52: #{tpu_custom_call.1} parent=1 // pred_region
      %126 = dma.done [#allocation7], 2048
    $region53: #{tpu_custom_call.1} parent=1 // pred_fallthru
      _
    // Predicated region
    $region54: #{tpu_custom_call.1} parent=1 // pred_check
      _
    $region55: #{tpu_custom_call.1} parent=1 // pred_check_branch
      %128 = sbr.rel (0) target = $region57
    $region56: #{tpu_custom_call.1} parent=1 // pred_region
      %129 = dma.done [#allocation10], 16
    $region57: #{tpu_custom_call.1} parent=1 // pred_fallthru
      _
    // Predicated region
    $region58: #{tpu_custom_call.1} parent=1 // pred_check
      _
    $region59: #{tpu_custom_call.1} parent=1 // pred_check_branch
      %131 = sbr.rel (0) target = $region61
    $region60: #{tpu_custom_call.1} parent=1 // pred_region
      %132 = dma.done [#allocation10], 512
    $region61: #{tpu_custom_call.1} parent=1 // pred_fallthru
      _
    // Predicated region
    $region62: #{tpu_custom_call.1} parent=1 // pred_check
      _
    $region63: #{tpu_custom_call.1} parent=1 // pred_check_branch
      %134 = sbr.rel (0) target = $region65
    $region64: #{tpu_custom_call.1} parent=1 // pred_region
      %135 = dma.done [#allocation13], 16
    $region65: #{tpu_custom_call.1} parent=1 // pred_fallthru
      _
    // Predicated region
    $region66: #{tpu_custom_call.1} parent=1 // pred_check
      _
    $region67: #{tpu_custom_call.1} parent=1 // pred_check_branch
      %137 = sbr.rel (0) target = $region69
    $region68: #{tpu_custom_call.1} parent=1 // pred_region
      %138 = dma.done [#allocation13], 16
    $region69: #{tpu_custom_call.1} parent=1 // pred_fallthru
      _
    // Predicated region
    $region70: #{tpu_custom_call.1} parent=1 // pred_check
      _
    $region71: #{tpu_custom_call.1} parent=1 // pred_check_branch
      %140 = sbr.rel (0) target = $region73
    $region72: #{tpu_custom_call.1} parent=1 // pred_region
      %141 = dma.done [#allocation16], 16
    $region73: #{tpu_custom_call.1} parent=1 // pred_fallthru
      _
    // Predicated region
    $region74: #{tpu_custom_call.1} parent=1 // pred_check
      _
    $region75: #{tpu_custom_call.1} parent=1 // pred_check_branch
      %143 = sbr.rel (0) target = $region77
    $region76: #{tpu_custom_call.1} parent=1 // pred_region
      %144 = dma.done [#allocation16], 16
    $region77: #{tpu_custom_call.1} parent=1 // pred_fallthru
      _
    %v145 = vld [vmem:[#allocation3] sm:$0xff]
    %v146 = vld [vmem:[#allocation8] sm:$0xff]
    %v147 = vld [vmem:[#allocation8 + $0x8] sm:$0xff]
    %v148 = vld [vmem:[#allocation8 + $0x10] sm:$0xff]
    %v149 = vld [vmem:[#allocation8 + $0x18] sm:$0xff]
    %v150 = vld [vmem:[#allocation8 + $0x20] sm:$0xff]
    %v151 = vld [vmem:[#allocation8 + $0x28] sm:$0xff]
    %v152 = vld [vmem:[#allocation8 + $0x30] sm:$0xff]
    %v153 = vld [vmem:[#allocation8 + $0x38] sm:$0xff]
    %v154 = vld [vmem:[#allocation8 + $0x40] sm:$0xff]
    %v155 = vld [vmem:[#allocation8 + $0x48] sm:$0xff]
    %v156 = vld [vmem:[#allocation8 + $0x50] sm:$0xff]
    %v157 = vld [vmem:[#allocation8 + $0x58] sm:$0xff]
    %v158 = vld [vmem:[#allocation8 + $0x60] sm:$0xff]
    %v159 = vld [vmem:[#allocation8 + $0x68] sm:$0xff]
    %v160 = vld [vmem:[#allocation8 + $0x70] sm:$0xff]
    %v161 = vld [vmem:[#allocation8 + $0x78] sm:$0xff]
    %v162 = vld [vmem:[#allocation9] sm:$0x1]
    %v164 = vlaneseq
    %v165 = vshrl.u32 %v164, 7
    %v166 = vsub.s32 0, %v165
    %v167 = vrot.slane %v162, %v166
    %169 = vmatprep.subr.mxu0 0.0
    %170 = vmatpush1.msra.mxu0 %v146
    %171 = vmatprep.subr.mxu0 0.0
    %172 = vmatpush1.msra.mxu0 %v147
    %173 = vmatprep.subr.mxu0 0.0
    %174 = vmatpush1.msra.mxu0 %v148
    %175 = vmatprep.subr.mxu0 0.0
    %176 = vmatpush1.msra.mxu0 %v149
    %177 = vmatprep.subr.mxu0 0.0
    %178 = vmatpush1.msra.mxu0 %v150
    %179 = vmatprep.subr.mxu0 0.0
    %180 = vmatpush1.msra.mxu0 %v151
    %181 = vmatprep.subr.mxu0 0.0
    %182 = vmatpush1.msra.mxu0 %v152
    %183 = vmatprep.subr.mxu0 0.0
    %184 = vmatpush1.msra.mxu0 %v153
    %185 = vmatprep.subr.mxu0 0.0
    %186 = vmatpush1.msra.mxu0 %v154
    %187 = vmatprep.subr.mxu0 0.0
    %188 = vmatpush1.msra.mxu0 %v155
    %189 = vmatprep.subr.mxu0 0.0
    %190 = vmatpush1.msra.mxu0 %v156
    %191 = vmatprep.subr.mxu0 0.0
    %192 = vmatpush1.msra.mxu0 %v157
    %193 = vmatprep.subr.mxu0 0.0
    %194 = vmatpush1.msra.mxu0 %v158
    %195 = vmatprep.subr.mxu0 0.0
    %196 = vmatpush1.msra.mxu0 %v159
    %197 = vmatprep.subr.mxu0 0.0
    %198 = vmatpush1.msra.mxu0 %v160
    %199 = vmatprep.subr.mxu0 0.0
    %200 = vmatpush1.msra.mxu0 %v161
    %201 = vmatprep.subr.mxu0 0.0
    %202 = vmatpush1.msra.mxu0 0.0
    %203 = vmatprep.subr.mxu0 0.0
    %204 = vmatpush1.msra.mxu0 0.0
    %205 = vmatprep.subr.mxu0 0.0
    %206 = vmatpush1.msra.mxu0 0.0
    %207 = vmatprep.subr.mxu0 0.0
    %208 = vmatpush1.msra.mxu0 0.0
    %209 = vmatprep.subr.mxu0 0.0
    %210 = vmatpush1.msra.mxu0 0.0
    %211 = vmatprep.subr.mxu0 0.0
    %212 = vmatpush1.msra.mxu0 0.0
    %213 = vmatprep.subr.mxu0 0.0
    %214 = vmatpush1.msra.mxu0 0.0
    %215 = vmatprep.subr.mxu0 0.0
    %216 = vmatpush1.msra.mxu0 0.0
    %217 = vmatprep.subr.mxu0 0.0
    %218 = vmatpush1.msra.mxu0 0.0
    %219 = vmatprep.subr.mxu0 0.0
    %220 = vmatpush1.msra.mxu0 0.0
    %221 = vmatprep.subr.mxu0 0.0
    %222 = vmatpush1.msra.mxu0 0.0
    %223 = vmatprep.subr.mxu0 0.0
    %224 = vmatpush1.msra.mxu0 0.0
    %225 = vmatprep.subr.mxu0 0.0
    %226 = vmatpush1.msra.mxu0 0.0
    %227 = vmatprep.subr.mxu0 0.0
    %228 = vmatpush1.msra.mxu0 0.0
    %229 = vmatprep.subr.mxu0 0.0
    %230 = vmatpush1.msra.mxu0 0.0
    %231 = vmatprep.subr.mxu0 0.0
    %232 = vmatpush1.msra.mxu0 0.0
    %233 = vmatprep.mubr.f32.mxu0 0.0
    %234 = vmatmul.mubr.f32.gmra.mrb[0].mxu0 %v145
    %v235 = vpop.f32.mrb[0].mxu0
    %v236 = vadd.f32 %v167, %v235
    %v237 = vpop.f32.mrb[0].mxu0
    %238 = vdwg.mxu0
    %v239 = vld [vmem:[#allocation6] sm:$0xff]
    %v240 = vadd.f32 %v236, %v239
    %v241 = vtanh.pop %v240
    %v242 = vld [vmem:[#allocation11] sm:$0xff]
    %v243 = vld [vmem:[#allocation11 + $0x8] sm:$0xff]
    %v244 = vld [vmem:[#allocation11 + $0x10] sm:$0xff]
    %v245 = vld [vmem:[#allocation11 + $0x18] sm:$0xff]
    %v246 = vld [vmem:[#allocation12] sm:$0x1]
    %v248 = vlaneseq
    %v249 = vshrl.u32 %v248, 7
    %v250 = vsub.s32 0, %v249
    %v251 = vrot.slane %v246, %v250
    %vm253 = vcmask 261120
    %v255 = vsel %vm253, %v241, 0
    %257 = vmatprep.subr.mxu0 0.0
    %258 = vmatpush1.msra.mxu0 %v242
    %259 = vmatprep.subr.mxu0 0.0
    %260 = vmatpush1.msra.mxu0 %v243
    %261 = vmatprep.subr.mxu0 0.0
    %262 = vmatpush1.msra.mxu0 %v244
    %263 = vmatprep.subr.mxu0 0.0
    %264 = vmatpush1.msra.mxu0 %v245
    %265 = vmatprep.subr.mxu0 0.0
    %266 = vmatpush1.msra.mxu0 0.0
    %267 = vmatprep.subr.mxu0 0.0
    %268 = vmatpush1.msra.mxu0 0.0
    %269 = vmatprep.subr.mxu0 0.0
    %270 = vmatpush1.msra.mxu0 0.0
    %271 = vmatprep.subr.mxu0 0.0
    %272 = vmatpush1.msra.mxu0 0.0
    %273 = vmatprep.subr.mxu0 0.0
    %274 = vmatpush1.msra.mxu0 0.0
    %275 = vmatprep.subr.mxu0 0.0
    %276 = vmatpush1.msra.mxu0 0.0
    %277 = vmatprep.subr.mxu0 0.0
    %278 = vmatpush1.msra.mxu0 0.0
    %279 = vmatprep.subr.mxu0 0.0
    %280 = vmatpush1.msra.mxu0 0.0
    %281 = vmatprep.subr.mxu0 0.0
    %282 = vmatpush1.msra.mxu0 0.0
    %283 = vmatprep.subr.mxu0 0.0
    %284 = vmatpush1.msra.mxu0 0.0
    %285 = vmatprep.subr.mxu0 0.0
    %286 = vmatpush1.msra.mxu0 0.0
    %287 = vmatprep.subr.mxu0 0.0
    %288 = vmatpush1.msra.mxu0 0.0
    %289 = vmatprep.subr.mxu0 0.0
    %290 = vmatpush1.msra.mxu0 0.0
    %291 = vmatprep.subr.mxu0 0.0
    %292 = vmatpush1.msra.mxu0 0.0
    %293 = vmatprep.subr.mxu0 0.0
    %294 = vmatpush1.msra.mxu0 0.0
    %295 = vmatprep.subr.mxu0 0.0
    %296 = vmatpush1.msra.mxu0 0.0
    %297 = vmatprep.subr.mxu0 0.0
    %298 = vmatpush1.msra.mxu0 0.0
    %299 = vmatprep.subr.mxu0 0.0
    %300 = vmatpush1.msra.mxu0 0.0
    %301 = vmatprep.subr.mxu0 0.0
    %302 = vmatpush1.msra.mxu0 0.0
    %303 = vmatprep.subr.mxu0 0.0
    %304 = vmatpush1.msra.mxu0 0.0
    %305 = vmatprep.subr.mxu0 0.0
    %306 = vmatpush1.msra.mxu0 0.0
    %307 = vmatprep.subr.mxu0 0.0
    %308 = vmatpush1.msra.mxu0 0.0
    %309 = vmatprep.subr.mxu0 0.0
    %310 = vmatpush1.msra.mxu0 0.0
    %311 = vmatprep.subr.mxu0 0.0
    %312 = vmatpush1.msra.mxu0 0.0
    %313 = vmatprep.subr.mxu0 0.0
    %314 = vmatpush1.msra.mxu0 0.0
    %315 = vmatprep.subr.mxu0 0.0
    %316 = vmatpush1.msra.mxu0 0.0
    %317 = vmatprep.subr.mxu0 0.0
    %318 = vmatpush1.msra.mxu0 0.0
    %319 = vmatprep.subr.mxu0 0.0
    %320 = vmatpush1.msra.mxu0 0.0
    %321 = vmatprep.mubr.f32.mxu0 0.0
    %322 = vmatmul.mubr.f32.gmra.mrb[0].mxu0 %v255
    %v323 = vpop.f32.mrb[0].mxu0
    %v324 = vadd.f32 %v251, %v323
    %v325 = vpop.f32.mrb[0].mxu0
    %326 = vdwg.mxu0
    %v327 = vmul.f32 %v324, 0.5
    %v328 = vmul.f32 %v324, 0.70710677
    %v329 = verf.f32.pop %v328
    %v330 = vadd.f32 %v329, 1.0
    %v331 = vmul.f32 %v327, %v330
    %v332 = vsel %vm253, %v331, 0.0
    %333 = vadd.xlane.f32.xlu0 %v332
    %v334 = vpop.xlane.xlu0 %333
    %v335 = vrcp.pop 32.0
    %v336 = vmul.f32 %v334, %v335
    %v337 = vsub.f32 %v331, %v336
    %v338 = vmul.f32 %v337, %v337
    %v339 = vsel %vm253, %v338, 0.0
    %340 = vadd.xlane.f32.xlu0 %v339
    %v341 = vpop.xlane.xlu0 %340
    %v342 = vmul.f32 %v341, %v335
    %v343 = vadd.f32 %v342, 1e-12
    %v344 = vrsqrt.pop %v343
    %v345 = vmul.f32 %v337, %v344
    %v346 = vld [vmem:[#allocation14] sm:$0x1]
    %v348 = vlaneseq
    %v349 = vshrl.u32 %v348, 7
    %v350 = vsub.s32 0, %v349
    %v351 = vrot.slane %v346, %v350
    %v353 = vmul.f32 %v345, %v351
    %v354 = vld [vmem:[#allocation15] sm:$0x1]
    %v356 = vlaneseq
    %v357 = vshrl.u32 %v356, 7
    %v358 = vsub.s32 0, %v357
    %v359 = vrot.slane %v354, %v358
    %v361 = vadd.f32 %v353, %v359
    %v362 = vld [vmem:[#allocation17] sm:$0x1]
    %v364 = vlaneseq
    %v365 = vshrl.u32 %v364, 7
    %v366 = vsub.s32 0, %v365
    %v367 = vrot.slane %v362, %v366
    %v369 = vmul.f32 %v361, %v367
    %v370 = vsel %vm253, %v369, 0.0
    %371 = vadd.xlane.f32.xlu0 %v370
    %v372 = vpop.xlane.xlu0 %371
    %s373 = sld [smem:[#allocation2]]
    %v374 = vstv %s373
    %v375 = vadd.f32 %v372, %v374
    %vm376 = vcmask 7168
    %377 = vst.msk [vmem:[#allocation18] sm:$0xff] %vm376, %v375
    // Predicated region
    $region78: #{tpu_custom_call.1} parent=1 // pred_check
      _
    $region79: #{tpu_custom_call.1} parent=1 // pred_check_branch
      %379 = sbr.rel (0) target = $region81
    $region80: #{tpu_custom_call.1} parent=1 // pred_region
      %s381 = ssub.s32 128, 128
      %382 = vsyncadd [#allocation5], %s381
      %s384 = sshll.u32 [#allocation18], 4
      %s385 = int_to_ptr.vmem [resolvable:$true] %s384
      %387 = dma.vmem_to_hbm [thread:$0]  %s385, 128, %s10, [#allocation5]
    $region81: #{tpu_custom_call.1} parent=1 // pred_fallthru
      _
    // Predicated region
    $region82: #{tpu_custom_call.1} parent=1 // pred_check
      _
    $region83: #{tpu_custom_call.1} parent=1 // pred_check_branch
      %389 = sbr.rel (0) target = $region85
    $region84: #{tpu_custom_call.1} parent=1 // pred_region
      %390 = dma.done [#allocation5], 128
    $region85: #{tpu_custom_call.1} parent=1 // pred_fallthru
      _
    %391 = vsyncpa [#allocation4], 1
    %392 = vsyncpa [#allocation7], 1
    %393 = vsyncpa [#allocation10], 1
    %394 = vsyncpa [#allocation13], 1
    %395 = vsyncpa [#allocation16], 1
    %396 = vsyncpa [#allocation5], 1

</llo_original>
